<compile_context>
chip_gen: v7x
topology: tpu7x:2x2x1
jax: 0.10.0
libtpu: 0.0.40
codegen_flags: <defaults>
</compile_context>

<pallas_src>
import functools

import numpy as np
import jax
import jax.numpy as jnp
from jax import lax
from jax.experimental import pallas as pl
from jax.experimental.pallas import tpu as pltpu


# -----------------------------------------------------------------------------
# Op configuration (mirrors PRIMITIVES / switch_cell of the PyTorch module).
# Each entry is either ('skip',) or ('conv', kh, kw, dilation).
# -----------------------------------------------------------------------------
PRIMITIVES = [
    ('skip',),                 # skip_connect (Identity, stride=1)
    ('conv', 1, 1, 1),         # 1x1 ReLU-Conv(-BN)
    ('conv', 3, 3, 1),         # 3x3 ReLU-Conv(-BN)
    ('conv', 3, 3, 2),         # 3x3 dilated (d=2) ReLU-Conv(-BN)
]


def _row_pad(ops):
    """Max vertical half-extent over all conv candidates."""
    p = 0
    for op in ops:
        if op[0] == 'conv':
            _, kh, _, d = op
            p = max(p, ((kh - 1) // 2) * d)
    return p


def build_mixed_weight(weights, ops, C, W):
    """Fuse all conv candidates into one banded im2col contraction weight.

    Returns wb of shape (KH*W*C, W*C) bf16 (KH = 2P+1 vertical bands) such
    that, with col[m, j*W*C + win*C + ci] = relu(x[b, h + j - P, win, ci])
    (zero where the row index falls outside the image),

        out[b, h, wout*C + co] = col @ wb

    equals the sum of all 'SAME'-padded ReLU-convs of the mixed op.  Edge
    truncation along W is folded into the weight (edge taps zeroed), so each
    band's contraction width is exactly W*C.
    """
    P = _row_pad(ops)
    KH = 2 * P + 1
    wb = jnp.zeros((KH, W, C, W, C), jnp.float32)
    wi = 0
    for op in ops:
        if op[0] != 'conv':
            continue
        _, kh, kw, d = op
        wgt = weights[wi].reshape(kh, kw, C, C).astype(jnp.float32)   # HWIO
        wi += 1
        # Constant 0/1 placement tensor: place[y, k, j, win, wout] = 1 iff tap
        # (y, k) of this op maps band j and input column win to output wout.
        place = np.zeros((kh, kw, KH, W, W), np.float32)
        for i_kh in range(kh):
            dy = (i_kh - (kh - 1) // 2) * d
            for i_kw in range(kw):
                dx = (i_kw - (kw - 1) // 2) * d
                for wout in range(W):
                    win = wout + dx
                    if 0 <= win < W:
                        place[i_kh, i_kw, dy + P, win, wout] = 1.0
        wb = wb + jnp.einsum('ykjab,ykio->jaibo', jnp.asarray(place), wgt)
    return wb.reshape(KH * W * C, W * C).astype(jnp.bfloat16)


def _pick_batch_block(N, H, target_rows=256):
    """Largest divisor of N so that B*H is roughly the MXU row target."""
    b = max(1, min(N, max(1, target_rows // max(H, 1))))
    while N % b:
        b -= 1
    return b


def _mixed_kernel(x_ref, wb_ref, out_ref, col_ref, *, B, H, WC, P, KH, n_skip):
    """Fused MixedOp kernel: B batch images per grid step.

    x_ref   : (B, H, WC)      f32   packed channels-last input block
    wb_ref  : (KH*WC, WC)     bf16  fused banded im2col weight (resident)
    out_ref : (B, H, WC)      f32
    col_ref : (B*H, KH*WC)    f32   im2col scratch
    """
    for b in range(B):                       # static unroll (B is small)
        xb = jnp.maximum(x_ref[b], 0.0)      # ReLU once per image, in f32
        base = b * H
        for j in range(KH):                  # static unroll over bands
            dy = j - P
            lo = max(0, -dy)
            hi = min(H, H - dy)
            c0 = j * WC
            # Valid rows of this band (full 128-lane stores).
            col_ref[base + lo:base + hi, c0:c0 + WC] = xb[lo + dy:hi + dy, :]
            # Halo rows (|dy| per band) re-zeroed every step so the kernel is
            # correct even when the "parallel" grid axis is split across cores.
            if lo:
                col_ref[base:base + lo, c0:c0 + WC] = (
                    jnp.zeros((lo, WC), jnp.float32))
            if hi < H:
                col_ref[base + hi:base + H, c0:c0 + WC] = (
                    jnp.zeros((H - hi, WC), jnp.float32))

    # Single MXU contraction covering every tap of every conv candidate:
    # (B*H, KH*WC) x (KH*WC, WC).  Exactly one f32->bf16 cast per element.
    col = col_ref[...].astype(jnp.bfloat16)
    acc = jnp.dot(col, wb_ref[...], preferred_element_type=jnp.float32)
    acc = acc.reshape(B, H, WC)

    # skip_connect uses the raw (un-ReLU'd) input.
    if n_skip == 1:
        acc = acc + x_ref[...]
    elif n_skip > 1:
        acc = acc + float(n_skip) * x_ref[...]

    out_ref[...] = acc.astype(out_ref.dtype)   # lane-dense store


def mixed_op_apply(x_packed, wb, *, W, C, P, n_skip):
    """Core forward on the packed lane-dense layout x: (N, H, W*C) f32."""
    N, H, WC = x_packed.shape
    assert WC == W * C
    if wb is None:                     # no conv candidates enabled
        return x_packed * float(n_skip)
    KH = 2 * P + 1
    B = _pick_batch_block(N, H)

    kernel = functools.partial(_mixed_kernel, B=B, H=H, WC=WC, P=P, KH=KH,
                               n_skip=n_skip)
    return pl.pallas_call(
        kernel,
        out_shape=jax.ShapeDtypeStruct((N, H, WC), jnp.float32),
        grid=(N // B,),
        in_specs=[
            pl.BlockSpec((B, H, WC), lambda n: (n, 0, 0)),
            # Constant index map -> weight slab DMA'd once, resident in VMEM.
            pl.BlockSpec((KH * WC, WC), lambda n: (0, 0)),
        ],
        out_specs=pl.BlockSpec((B, H, WC), lambda n: (n, 0, 0)),
        scratch_shapes=[pltpu.VMEM((B * H, KH * WC), jnp.float32)],
        compiler_params=pltpu.CompilerParams(
            dimension_semantics=("parallel",)),
    )(x_packed, wb)


def mixed_op_forward(x_nchw, weights, ops, stride=1):
    """MixedOp forward, PyTorch-compatible NCHW in / NCHW out."""
    assert stride == 1, "TODO(synk): stride>1 (FactorizedReduce skip) not implemented"
    N, C, H, W = x_nchw.shape

    n_skip = sum(1 for op in ops if op[0] == 'skip')
    has_conv = any(op[0] == 'conv' for op in ops)
    P = _row_pad(ops)
    wb = build_mixed_weight(weights, ops, C, W) if has_conv else None

    # NOTE: these transposes exist only for NCHW compatibility with the
    # PyTorch module; a full network should keep activations in the packed
    # (N, H, W*C) layout and call mixed_op_apply() directly (saves two
    # full-tensor HBM round trips per MixedOp).
    xp = jnp.transpose(x_nchw, (0, 2, 3, 1)).astype(jnp.float32).reshape(N, H, W * C)
    out = mixed_op_apply(xp, wb, W=W, C=C, P=P, n_skip=n_skip)
    return jnp.transpose(out.reshape(N, H, W, C), (0, 3, 1, 2))


def mixed_op_reference(x_nchw, weights, ops):
    """Pure-JAX f32 reference (lax conv) for validation."""
    x = jnp.transpose(x_nchw, (0, 2, 3, 1)).astype(jnp.float32)   # NHWC
    out = jnp.zeros_like(x)
    wi = 0
    for op in ops:
        if op[0] == 'skip':
            out = out + x
        else:
            _, kh, kw, d = op
            w = weights[wi].reshape(kh, kw, x.shape[-1], x.shape[-1])  # HWIO
            wi += 1
            xr = jnp.maximum(x, 0.0)
            out = out + lax.conv_general_dilated(
                xr, w, window_strides=(1, 1), padding='SAME',
                rhs_dilation=(d, d),
                dimension_numbers=('NHWC', 'HWIO', 'NHWC'))
    return jnp.transpose(out, (0, 3, 1, 2))


if __name__ == "__main__":
    key = jax.random.PRNGKey(0)

    # Small shapes consistent with the module: C -> C, stride = 1.
    # C=8, W=16 makes W*C = 128 (exactly one lane group).
    N, C, H, W = 2, 8, 16, 16
    stride = 1
    switch_cell = [True, True, True, True]
    ops = [p for p, on in zip(PRIMITIVES, switch_cell) if on]

    # Deterministic parameter init for each conv op: (kh*kw, C, C) HWIO-flat.
    weights = []
    for op in ops:
        if op[0] == 'conv':
            _, kh, kw, d = op
            key, sub = jax.random.split(key)
            weights.append(
                0.1 * jax.random.normal(sub, (kh * kw, C, C), dtype=jnp.float32))

    key, sub = jax.random.split(key)
    x = jax.random.normal(sub, (N, C, H, W), dtype=jnp.float32)

    fwd = jax.jit(functools.partial(mixed_op_forward, ops=ops, stride=stride))
    y = fwd(x, weights)
    y = jax.block_until_ready(y)

    y_ref = mixed_op_reference(x, weights, ops)
    assert y.shape == (N, C, H, W)
    # Tolerance loosened vs the f32 reference because conv operands are fed to
    # the MXU in bf16 (accumulation stays f32).
    assert jnp.allclose(y, y_ref, atol=5e-2, rtol=5e-2), "mismatch vs reference"

    print("KERNEL_OK")
</pallas_src>

<mosaic_0001>
module attributes {stable_mosaic.version = 11 : i64} {
  func.func @_mixed_kernel(%arg0: i32, %arg1: memref<2x16x128xf32, #tpu.memory_space<vmem>>, %arg2: memref<640x128xbf16, #tpu.memory_space<vmem>>, %arg3: memref<2x16x128xf32, #tpu.memory_space<vmem>>, %arg4: memref<32x640xf32, #tpu.memory_space<vmem>>) attributes {dimension_semantics = [#tpu.dimension_semantics<parallel>], iteration_bounds = array<i64: 1>, scalar_prefetch = 0 : i64, scratch_operands = 1 : i64, tpu.core_type = #tpu.core_type<tc>, window_params = [{transform_indices = @transform_0, window_bounds = array<i64: 2, 16, 128>}, {pipeline_mode = #tpu.pipeline_mode<synchronous>, transform_indices = @transform_1, window_bounds = array<i64: 640, 128>}, {transform_indices = @transform_2, window_bounds = array<i64: 2, 16, 128>}]} {
    %c0 = arith.constant 0 : index
    %c0_0 = arith.constant 0 : index
    %c0_1 = arith.constant 0 : index
    %0 = vector.load %arg1[%c0, %c0_0, %c0_1] : memref<2x16x128xf32, #tpu.memory_space<vmem>>, vector<1x16x128xf32>
    %1 = vector.shape_cast %0 : vector<1x16x128xf32> to vector<16x128xf32>
    %cst = arith.constant 0.000000e+00 : f32
    %2 = vector.broadcast %cst : f32 to vector<16x128xf32>
    %3 = arith.maximumf %1, %2 : vector<16x128xf32>
    %4 = vector.extract_strided_slice %3 {offsets = [0, 0], sizes = [14, 128], strides = [1, 1]} : vector<16x128xf32> to vector<14x128xf32>
    %c2 = arith.constant 2 : index
    %c0_2 = arith.constant 0 : index
    %5 = vector.load %arg4[%c2, %c0_2] : memref<32x640xf32, #tpu.memory_space<vmem>>, vector<14x128xf32>
    tpu.vector_store %arg4[%c2, %c0_2], %4 {strides = array<i32>} : memref<32x640xf32, #tpu.memory_space<vmem>>, vector<14x128xf32>,
    %cst_3 = arith.constant 0.000000e+00 : f32
    %6 = vector.broadcast %cst_3 : f32 to vector<2x128xf32>
    %c0_4 = arith.constant 0 : index
    %c0_5 = arith.constant 0 : index
    %7 = vector.load %arg4[%c0_4, %c0_5] : memref<32x640xf32, #tpu.memory_space<vmem>>, vector<2x128xf32>
    tpu.vector_store %arg4[%c0_4, %c0_5], %6 {strides = array<i32>} : memref<32x640xf32, #tpu.memory_space<vmem>>, vector<2x128xf32>,
    %8 = vector.extract_strided_slice %3 {offsets = [0, 0], sizes = [15, 128], strides = [1, 1]} : vector<16x128xf32> to vector<15x128xf32>
    %c1 = arith.constant 1 : index
    %c128 = arith.constant 128 : index
    %9 = vector.load %arg4[%c1, %c128] : memref<32x640xf32, #tpu.memory_space<vmem>>, vector<15x128xf32>
    tpu.vector_store %arg4[%c1, %c128], %8 {strides = array<i32>} : memref<32x640xf32, #tpu.memory_space<vmem>>, vector<15x128xf32>,
    %cst_6 = arith.constant 0.000000e+00 : f32
    %10 = vector.broadcast %cst_6 : f32 to vector<1x128xf32>
    %c0_7 = arith.constant 0 : index
    %c128_8 = arith.constant 128 : index
    %11 = vector.load %arg4[%c0_7, %c128_8] : memref<32x640xf32, #tpu.memory_space<vmem>>, vector<1x128xf32>
    tpu.vector_store %arg4[%c0_7, %c128_8], %10 {strides = array<i32>} : memref<32x640xf32, #tpu.memory_space<vmem>>, vector<1x128xf32>,
    %c0_9 = arith.constant 0 : index
    %c256 = arith.constant 256 : index
    %12 = vector.load %arg4[%c0_9, %c256] : memref<32x640xf32, #tpu.memory_space<vmem>>, vector<16x128xf32>
    tpu.vector_store %arg4[%c0_9, %c256], %3 {strides = array<i32>} : memref<32x640xf32, #tpu.memory_space<vmem>>, vector<16x128xf32>,
    %13 = vector.extract_strided_slice %3 {offsets = [1, 0], sizes = [15, 128], strides = [1, 1]} : vector<16x128xf32> to vector<15x128xf32>
    %c0_10 = arith.constant 0 : index
    %c384 = arith.constant 384 : index
    %14 = vector.load %arg4[%c0_10, %c384] : memref<32x640xf32, #tpu.memory_space<vmem>>, vector<15x128xf32>
    tpu.vector_store %arg4[%c0_10, %c384], %13 {strides = array<i32>} : memref<32x640xf32, #tpu.memory_space<vmem>>, vector<15x128xf32>,
    %cst_11 = arith.constant 0.000000e+00 : f32
    %15 = vector.broadcast %cst_11 : f32 to vector<1x128xf32>
    %c15 = arith.constant 15 : index
    %c384_12 = arith.constant 384 : index
    %16 = vector.load %arg4[%c15, %c384_12] : memref<32x640xf32, #tpu.memory_space<vmem>>, vector<1x128xf32>
    tpu.vector_store %arg4[%c15, %c384_12], %15 {strides = array<i32>} : memref<32x640xf32, #tpu.memory_space<vmem>>, vector<1x128xf32>,
    %17 = vector.extract_strided_slice %3 {offsets = [2, 0], sizes = [14, 128], strides = [1, 1]} : vector<16x128xf32> to vector<14x128xf32>
    %c0_13 = arith.constant 0 : index
    %c512 = arith.constant 512 : index
    %18 = vector.load %arg4[%c0_13, %c512] : memref<32x640xf32, #tpu.memory_space<vmem>>, vector<14x128xf32>
    tpu.vector_store %arg4[%c0_13, %c512], %17 {strides = array<i32>} : memref<32x640xf32, #tpu.memory_space<vmem>>, vector<14x128xf32>,
    %cst_14 = arith.constant 0.000000e+00 : f32
    %19 = vector.broadcast %cst_14 : f32 to vector<2x128xf32>
    %c14 = arith.constant 14 : index
    %c512_15 = arith.constant 512 : index
    %20 = vector.load %arg4[%c14, %c512_15] : memref<32x640xf32, #tpu.memory_space<vmem>>, vector<2x128xf32>
    tpu.vector_store %arg4[%c14, %c512_15], %19 {strides = array<i32>} : memref<32x640xf32, #tpu.memory_space<vmem>>, vector<2x128xf32>,
    %c1_16 = arith.constant 1 : index
    %c0_17 = arith.constant 0 : index
    %c0_18 = arith.constant 0 : index
    %21 = vector.load %arg1[%c1_16, %c0_17, %c0_18] : memref<2x16x128xf32, #tpu.memory_space<vmem>>, vector<1x16x128xf32>
    %22 = vector.shape_cast %21 : vector<1x16x128xf32> to vector<16x128xf32>
    %cst_19 = arith.constant 0.000000e+00 : f32
    %23 = vector.broadcast %cst_19 : f32 to vector<16x128xf32>
    %24 = arith.maximumf %22, %23 : vector<16x128xf32>
    %25 = vector.extract_strided_slice %24 {offsets = [0, 0], sizes = [14, 128], strides = [1, 1]} : vector<16x128xf32> to vector<14x128xf32>
    %c18 = arith.constant 18 : index
    %c0_20 = arith.constant 0 : index
    %26 = vector.load %arg4[%c18, %c0_20] : memref<32x640xf32, #tpu.memory_space<vmem>>, vector<14x128xf32>
    tpu.vector_store %arg4[%c18, %c0_20], %25 {strides = array<i32>} : memref<32x640xf32, #tpu.memory_space<vmem>>, vector<14x128xf32>,
    %cst_21 = arith.constant 0.000000e+00 : f32
    %27 = vector.broadcast %cst_21 : f32 to vector<2x128xf32>
    %c16 = arith.constant 16 : index
    %c0_22 = arith.constant 0 : index
    %28 = vector.load %arg4[%c16, %c0_22] : memref<32x640xf32, #tpu.memory_space<vmem>>, vector<2x128xf32>
    tpu.vector_store %arg4[%c16, %c0_22], %27 {strides = array<i32>} : memref<32x640xf32, #tpu.memory_space<vmem>>, vector<2x128xf32>,
    %29 = vector.extract_strided_slice %24 {offsets = [0, 0], sizes = [15, 128], strides = [1, 1]} : vector<16x128xf32> to vector<15x128xf32>
    %c17 = arith.constant 17 : index
    %c128_23 = arith.constant 128 : index
    %30 = vector.load %arg4[%c17, %c128_23] : memref<32x640xf32, #tpu.memory_space<vmem>>, vector<15x128xf32>
    tpu.vector_store %arg4[%c17, %c128_23], %29 {strides = array<i32>} : memref<32x640xf32, #tpu.memory_space<vmem>>, vector<15x128xf32>,
    %cst_24 = arith.constant 0.000000e+00 : f32
    %31 = vector.broadcast %cst_24 : f32 to vector<1x128xf32>
    %c16_25 = arith.constant 16 : index
    %c128_26 = arith.constant 128 : index
    %32 = vector.load %arg4[%c16_25, %c128_26] : memref<32x640xf32, #tpu.memory_space<vmem>>, vector<1x128xf32>
    tpu.vector_store %arg4[%c16_25, %c128_26], %31 {strides = array<i32>} : memref<32x640xf32, #tpu.memory_space<vmem>>, vector<1x128xf32>,
    %c16_27 = arith.constant 16 : index
    %c256_28 = arith.constant 256 : index
    %33 = vector.load %arg4[%c16_27, %c256_28] : memref<32x640xf32, #tpu.memory_space<vmem>>, vector<16x128xf32>
    tpu.vector_store %arg4[%c16_27, %c256_28], %24 {strides = array<i32>} : memref<32x640xf32, #tpu.memory_space<vmem>>, vector<16x128xf32>,
    %34 = vector.extract_strided_slice %24 {offsets = [1, 0], sizes = [15, 128], strides = [1, 1]} : vector<16x128xf32> to vector<15x128xf32>
    %c16_29 = arith.constant 16 : index
    %c384_30 = arith.constant 384 : index
    %35 = vector.load %arg4[%c16_29, %c384_30] : memref<32x640xf32, #tpu.memory_space<vmem>>, vector<15x128xf32>
    tpu.vector_store %arg4[%c16_29, %c384_30], %34 {strides = array<i32>} : memref<32x640xf32, #tpu.memory_space<vmem>>, vector<15x128xf32>,
    %cst_31 = arith.constant 0.000000e+00 : f32
    %36 = vector.broadcast %cst_31 : f32 to vector<1x128xf32>
    %c31 = arith.constant 31 : index
    %c384_32 = arith.constant 384 : index
    %37 = vector.load %arg4[%c31, %c384_32] : memref<32x640xf32, #tpu.memory_space<vmem>>, vector<1x128xf32>
    tpu.vector_store %arg4[%c31, %c384_32], %36 {strides = array<i32>} : memref<32x640xf32, #tpu.memory_space<vmem>>, vector<1x128xf32>,
    %38 = vector.extract_strided_slice %24 {offsets = [2, 0], sizes = [14, 128], strides = [1, 1]} : vector<16x128xf32> to vector<14x128xf32>
    %c16_33 = arith.constant 16 : index
    %c512_34 = arith.constant 512 : index
    %39 = vector.load %arg4[%c16_33, %c512_34] : memref<32x640xf32, #tpu.memory_space<vmem>>, vector<14x128xf32>
    tpu.vector_store %arg4[%c16_33, %c512_34], %38 {strides = array<i32>} : memref<32x640xf32, #tpu.memory_space<vmem>>, vector<14x128xf32>,
    %cst_35 = arith.constant 0.000000e+00 : f32
    %40 = vector.broadcast %cst_35 : f32 to vector<2x128xf32>
    %c30 = arith.constant 30 : index
    %c512_36 = arith.constant 512 : index
    %41 = vector.load %arg4[%c30, %c512_36] : memref<32x640xf32, #tpu.memory_space<vmem>>, vector<2x128xf32>
    tpu.vector_store %arg4[%c30, %c512_36], %40 {strides = array<i32>} : memref<32x640xf32, #tpu.memory_space<vmem>>, vector<2x128xf32>,
    %c0_37 = arith.constant 0 : index
    %c0_38 = arith.constant 0 : index
    %42 = vector.load %arg4[%c0_37, %c0_38] : memref<32x640xf32, #tpu.memory_space<vmem>>, vector<32x640xf32>
    %43 = arith.truncf %42 : vector<32x640xf32> to vector<32x640xbf16>
    %c0_39 = arith.constant 0 : index
    %c0_40 = arith.constant 0 : index
    %44 = vector.load %arg2[%c0_39, %c0_40] : memref<640x128xbf16, #tpu.memory_space<vmem>>, vector<640x128xbf16>
    %cst_41 = arith.constant dense<0.000000e+00> : vector<32x128xf32>
    %45 = tpu.matmul %43, %44, %cst_41 {dimension_numbers = #tpu.dot_dimension_numbers<[1], [0], [0], [1], [0, 0, 1, 1], [], []>} : vector<32x640xbf16>, vector<640x128xbf16>, vector<32x128xf32> -> vector<32x128xf32>
    %46 = vector.shape_cast %45 : vector<32x128xf32> to vector<2x16x128xf32>
    %c0_42 = arith.constant 0 : index
    %c0_43 = arith.constant 0 : index
    %c0_44 = arith.constant 0 : index
    %47 = vector.load %arg1[%c0_42, %c0_43, %c0_44] : memref<2x16x128xf32, #tpu.memory_space<vmem>>, vector<2x16x128xf32>
    %48 = arith.addf %46, %47 : vector<2x16x128xf32>
    %c0_45 = arith.constant 0 : index
    %c0_46 = arith.constant 0 : index
    %c0_47 = arith.constant 0 : index
    %49 = vector.load %arg3[%c0_45, %c0_46, %c0_47] : memref<2x16x128xf32, #tpu.memory_space<vmem>>, vector<2x16x128xf32>
    tpu.vector_store %arg3[%c0_45, %c0_46, %c0_47], %48 {strides = array<i32>} : memref<2x16x128xf32, #tpu.memory_space<vmem>>, vector<2x16x128xf32>,
    return
  }
  func.func @transform_0(%arg0: i32) -> (i32, i32, i32) {
    %c0_i32 = arith.constant 0 : i32
    %c0_i32_0 = arith.constant 0 : i32
    %c0_i32_1 = arith.constant 0 : i32
    return %arg0, %c0_i32, %c0_i32_0 : i32, i32, i32
  }
  func.func @transform_1(%arg0: i32) -> (i32, i32) {
    %c0_i32 = arith.constant 0 : i32
    %c0_i32_0 = arith.constant 0 : i32
    %c0_i32_1 = arith.constant 0 : i32
    return %c0_i32, %c0_i32_0 : i32, i32
  }
  func.func @transform_2(%arg0: i32) -> (i32, i32, i32) {
    %c0_i32 = arith.constant 0 : i32
    %c0_i32_0 = arith.constant 0 : i32
    %c0_i32_1 = arith.constant 0 : i32
    return %arg0, %c0_i32, %c0_i32_0 : i32, i32, i32
  }
}

</mosaic_0001>

<llo_original>
// kernel: mixed_op_forward.1
$region0: #{mixed_op_forward.1}
  #allocation0 [shape = 'u32[]', space=smem, size = 0x4, offset = 0x4, fixed_abs, tag = 'smem constant byte address 0x4 - core index']
  #allocation1 [shape = 'u32[144,128]{1,0:T(1,128)}', space=vmem, size = 0x12000, scoped, tag = 'internal scratch']
  #allocation2 [shape = 'f32[32,640]{1,0:T(8,128)}', space=vmem, size = 0x14000, scoped, tag = 'scratch operand']
  %s0 = inlined_call_operand.vmem [shape: f32[2,16,128], index: 0, kind: input, shape index: {}]
  %s1 = inlined_call_operand.vmem [shape: bf16[640,128], index: 1, kind: input, shape index: {}]
  %s2 = inlined_call_operand.vmem [shape: f32[2,16,128], index: 2, kind: output, shape index: {}]
  %s3 = sld [smem:[#allocation0]]
  $region18: #{mixed_op_forward.1} parent=0
    _
  %s5 = ssub.s32 1, %s3
  %s6 = scalar_select 0, %s5, %s3
  // Predicated region
  $region2: #{mixed_op_forward.1} parent=0 // pred_check
    _
  $region3: #{mixed_op_forward.1} parent=0 // pred_check_branch
    %8 = sbr.rel (0) target = $region5
  $region4: #{mixed_op_forward.1} parent=0 // pred_region
    _
  $region5: #{mixed_op_forward.1} parent=0 // pred_fallthru
    _
  // Predicated region
  $region6: #{mixed_op_forward.1} parent=0 // pred_check
    _
  $region7: #{mixed_op_forward.1} parent=0 // pred_check_branch
    %10 = sbr.rel (0) target = $region9
  $region8: #{mixed_op_forward.1} parent=0 // pred_region
    _
  $region9: #{mixed_op_forward.1} parent=0 // pred_fallthru
    _
  %v12 = vld [vmem:[%s0] sm:$0xff]
  %v13 = vld [vmem:[%s0 + $0x8] sm:$0xff]
  %v14 = vmax.f32 %v12, 0.0
  %v15 = vmax.f32 %v13, 0.0
  %vm18 = vcmask 1041408
  %v19 = vrot.slane %v14, 6
  %v20 = vrot.slane %v15, 6
  %v21 = vsel %vm18, %v19, %v20
  %24 = vst [vmem:[#allocation2] sm:$0xfc] %v19
  %25 = vst [vmem:[#allocation2 + $0x28] sm:$0xff] %v21
  %26 = vst [vmem:[#allocation2] sm:$0x3] 0.0
  %vm27 = vcmask 1040384
  %v28 = vrot.slane %v14, 7
  %v29 = vrot.slane %v15, 7
  %v30 = vsel %vm27, %v28, %v29
  %33 = vst [vmem:[#allocation2 + $0x8] sm:$0xfe] %v28
  %34 = vst [vmem:[#allocation2 + $0x30] sm:$0xff] %v30
  %35 = vst [vmem:[#allocation2 + $0x8] sm:$0x1] 0.0
  %36 = vst [vmem:[#allocation2 + $0x10] sm:$0xff] %v14
  %37 = vst [vmem:[#allocation2 + $0x38] sm:$0xff] %v15
  %vm38 = vcmask 1046528
  %v39 = vrot.slane %v14, 1
  %v40 = vrot.slane %v15, 1
  %v41 = vsel %vm38, %v39, %v40
  %44 = vst [vmem:[#allocation2 + $0x18] sm:$0xff] %v41
  %45 = vst [vmem:[#allocation2 + $0x40] sm:$0x7f] %v40
  %46 = vst [vmem:[#allocation2 + $0x47] sm:$0x1] 0.0
  %vm47 = vcmask 1045504
  %v48 = vrot.slane %v14, 2
  %v49 = vrot.slane %v15, 2
  %v50 = vsel %vm47, %v48, %v49
  %53 = vst [vmem:[#allocation2 + $0x20] sm:$0xff] %v50
  %54 = vst [vmem:[#allocation2 + $0x48] sm:$0x3f] %v49
  %55 = vst [vmem:[#allocation2 + $0x48] sm:$0xc0] 0.0
  %s56 = scalar_lea.vmem %s0, 16
  %v57 = vld [vmem:[%s56] sm:$0xff]
  %v58 = vld [vmem:[%s56 + $0x8] sm:$0xff]
  %v59 = vmax.f32 %v57, 0.0
  %v60 = vmax.f32 %v58, 0.0
  %v63 = vrot.slane %v59, 6
  %v64 = vrot.slane %v60, 6
  %v65 = vsel %vm18, %v63, %v64
  %68 = vst [vmem:[#allocation2 + $0x50] sm:$0xfc] %v63
  %69 = vst [vmem:[#allocation2 + $0x78] sm:$0xff] %v65
  %70 = vst [vmem:[#allocation2 + $0x50] sm:$0x3] 0.0
  %v71 = vrot.slane %v59, 7
  %v72 = vrot.slane %v60, 7
  %v73 = vsel %vm27, %v71, %v72
  %76 = vst [vmem:[#allocation2 + $0x58] sm:$0xfe] %v71
  %77 = vst [vmem:[#allocation2 + $0x80] sm:$0xff] %v73
  %78 = vst [vmem:[#allocation2 + $0x58] sm:$0x1] 0.0
  %79 = vst [vmem:[#allocation2 + $0x60] sm:$0xff] %v59
  %80 = vst [vmem:[#allocation2 + $0x88] sm:$0xff] %v60
  %v81 = vrot.slane %v59, 1
  %v82 = vrot.slane %v60, 1
  %v83 = vsel %vm38, %v81, %v82
  %86 = vst [vmem:[#allocation2 + $0x68] sm:$0xff] %v83
  %87 = vst [vmem:[#allocation2 + $0x90] sm:$0x7f] %v82
  %88 = vst [vmem:[#allocation2 + $0x97] sm:$0x1] 0.0
  %v89 = vrot.slane %v59, 2
  %v90 = vrot.slane %v60, 2
  %v91 = vsel %vm47, %v89, %v90
  %94 = vst [vmem:[#allocation2 + $0x70] sm:$0xff] %v91
  %95 = vst [vmem:[#allocation2 + $0x98] sm:$0x3f] %v90
  %96 = vst [vmem:[#allocation2 + $0x98] sm:$0xc0] 0.0
  %v97 = vld [vmem:[#allocation2] sm:$0xff]
  %v98 = vld [vmem:[#allocation2 + $0x8] sm:$0xff]
  %v99 = vld [vmem:[#allocation2 + $0x10] sm:$0xff]
  %v100 = vld [vmem:[#allocation2 + $0x18] sm:$0xff]
  %v101 = vld [vmem:[#allocation2 + $0x20] sm:$0xff]
  %v102 = vld [vmem:[#allocation2 + $0x28] sm:$0xff]
  %v103 = vld [vmem:[#allocation2 + $0x30] sm:$0xff]
  %v104 = vld [vmem:[#allocation2 + $0x38] sm:$0xff]
  %v105 = vld [vmem:[#allocation2 + $0x40] sm:$0xff]
  %v106 = vld [vmem:[#allocation2 + $0x48] sm:$0xff]
  %v107 = vld [vmem:[#allocation2 + $0x50] sm:$0xff]
  %v108 = vld [vmem:[#allocation2 + $0x58] sm:$0xff]
  %v109 = vld [vmem:[#allocation2 + $0x60] sm:$0xff]
  %v110 = vld [vmem:[#allocation2 + $0x68] sm:$0xff]
  %v111 = vld [vmem:[#allocation2 + $0x70] sm:$0xff]
  %v112 = vld [vmem:[#allocation2 + $0x78] sm:$0xff]
  %v113 = vld [vmem:[#allocation2 + $0x80] sm:$0xff]
  %v114 = vld [vmem:[#allocation2 + $0x88] sm:$0xff]
  %v115 = vld [vmem:[#allocation2 + $0x90] sm:$0xff]
  %v116 = vld [vmem:[#allocation2 + $0x98] sm:$0xff]
  %v117 = vpack.c.bf16 %v102, %v97
  %v118 = vpack.c.bf16 %v103, %v98
  %v119 = vpack.c.bf16 %v104, %v99
  %v120 = vpack.c.bf16 %v105, %v100
  %v121 = vpack.c.bf16 %v106, %v101
  %v122 = vpack.c.bf16 %v112, %v107
  %v123 = vpack.c.bf16 %v113, %v108
  %v124 = vpack.c.bf16 %v114, %v109
  %v125 = vpack.c.bf16 %v115, %v110
  %v126 = vpack.c.bf16 %v116, %v111
  %v127 = vld [vmem:[%s1] sm:$0xf]
  %v128 = vld [vmem:[%s1 + $0x4] sm:$0xf]
  %v129 = vld [vmem:[%s1 + $0x8] sm:$0xf]
  %v130 = vld [vmem:[%s1 + $0xc] sm:$0xf]
  %v131 = vld [vmem:[%s1 + $0x10] sm:$0xf]
  %v132 = vld [vmem:[%s1 + $0x14] sm:$0xf]
  %v133 = vld [vmem:[%s1 + $0x18] sm:$0xf]
  %v134 = vld [vmem:[%s1 + $0x1c] sm:$0xf]
  %v135 = vld [vmem:[%s1 + $0x20] sm:$0xf]
  %v136 = vld [vmem:[%s1 + $0x24] sm:$0xf]
  %v137 = vld [vmem:[%s1 + $0x28] sm:$0xf]
  %v138 = vld [vmem:[%s1 + $0x2c] sm:$0xf]
  %v139 = vld [vmem:[%s1 + $0x30] sm:$0xf]
  %v140 = vld [vmem:[%s1 + $0x34] sm:$0xf]
  %v141 = vld [vmem:[%s1 + $0x38] sm:$0xf]
  %v142 = vld [vmem:[%s1 + $0x3c] sm:$0xf]
  %v143 = vld [vmem:[%s1 + $0x40] sm:$0xf]
  %v144 = vld [vmem:[%s1 + $0x44] sm:$0xf]
  %v145 = vld [vmem:[%s1 + $0x48] sm:$0xf]
  %v146 = vld [vmem:[%s1 + $0x4c] sm:$0xf]
  %v147 = vld [vmem:[%s1 + $0x50] sm:$0xf]
  %v148 = vld [vmem:[%s1 + $0x54] sm:$0xf]
  %v149 = vld [vmem:[%s1 + $0x58] sm:$0xf]
  %v150 = vld [vmem:[%s1 + $0x5c] sm:$0xf]
  %v151 = vld [vmem:[%s1 + $0x60] sm:$0xf]
  %v152 = vld [vmem:[%s1 + $0x64] sm:$0xf]
  %v153 = vld [vmem:[%s1 + $0x68] sm:$0xf]
  %v154 = vld [vmem:[%s1 + $0x6c] sm:$0xf]
  %v155 = vld [vmem:[%s1 + $0x70] sm:$0xf]
  %v156 = vld [vmem:[%s1 + $0x74] sm:$0xf]
  %v157 = vld [vmem:[%s1 + $0x78] sm:$0xf]
  %v158 = vld [vmem:[%s1 + $0x7c] sm:$0xf]
  %v159 = vld [vmem:[%s1 + $0x80] sm:$0xf]
  %v160 = vld [vmem:[%s1 + $0x84] sm:$0xf]
  %v161 = vld [vmem:[%s1 + $0x88] sm:$0xf]
  %v162 = vld [vmem:[%s1 + $0x8c] sm:$0xf]
  %v163 = vld [vmem:[%s1 + $0x90] sm:$0xf]
  %v164 = vld [vmem:[%s1 + $0x94] sm:$0xf]
  %v165 = vld [vmem:[%s1 + $0x98] sm:$0xf]
  %v166 = vld [vmem:[%s1 + $0x9c] sm:$0xf]
  %v167 = vld [vmem:[%s1 + $0xa0] sm:$0xf]
  %v168 = vld [vmem:[%s1 + $0xa4] sm:$0xf]
  %v169 = vld [vmem:[%s1 + $0xa8] sm:$0xf]
  %v170 = vld [vmem:[%s1 + $0xac] sm:$0xf]
  %v171 = vld [vmem:[%s1 + $0xb0] sm:$0xf]
  %v172 = vld [vmem:[%s1 + $0xb4] sm:$0xf]
  %v173 = vld [vmem:[%s1 + $0xb8] sm:$0xf]
  %v174 = vld [vmem:[%s1 + $0xbc] sm:$0xf]
  %v175 = vld [vmem:[%s1 + $0xc0] sm:$0xf]
  %v176 = vld [vmem:[%s1 + $0xc4] sm:$0xf]
  %v177 = vld [vmem:[%s1 + $0xc8] sm:$0xf]
  %v178 = vld [vmem:[%s1 + $0xcc] sm:$0xf]
  %v179 = vld [vmem:[%s1 + $0xd0] sm:$0xf]
  %v180 = vld [vmem:[%s1 + $0xd4] sm:$0xf]
  %v181 = vld [vmem:[%s1 + $0xd8] sm:$0xf]
  %v182 = vld [vmem:[%s1 + $0xdc] sm:$0xf]
  %v183 = vld [vmem:[%s1 + $0xe0] sm:$0xf]
  %v184 = vld [vmem:[%s1 + $0xe4] sm:$0xf]
  %v185 = vld [vmem:[%s1 + $0xe8] sm:$0xf]
  %v186 = vld [vmem:[%s1 + $0xec] sm:$0xf]
  %v187 = vld [vmem:[%s1 + $0xf0] sm:$0xf]
  %v188 = vld [vmem:[%s1 + $0xf4] sm:$0xf]
  %v189 = vld [vmem:[%s1 + $0xf8] sm:$0xf]
  %v190 = vld [vmem:[%s1 + $0xfc] sm:$0xf]
  %v191 = vld [vmem:[%s1 + $0x100] sm:$0xf]
  %v192 = vld [vmem:[%s1 + $0x104] sm:$0xf]
  %v193 = vld [vmem:[%s1 + $0x108] sm:$0xf]
  %v194 = vld [vmem:[%s1 + $0x10c] sm:$0xf]
  %v195 = vld [vmem:[%s1 + $0x110] sm:$0xf]
  %v196 = vld [vmem:[%s1 + $0x114] sm:$0xf]
  %v197 = vld [vmem:[%s1 + $0x118] sm:$0xf]
  %v198 = vld [vmem:[%s1 + $0x11c] sm:$0xf]
  %v199 = vld [vmem:[%s1 + $0x120] sm:$0xf]
  %v200 = vld [vmem:[%s1 + $0x124] sm:$0xf]
  %v201 = vld [vmem:[%s1 + $0x128] sm:$0xf]
  %v202 = vld [vmem:[%s1 + $0x12c] sm:$0xf]
  %v203 = vld [vmem:[%s1 + $0x130] sm:$0xf]
  %v204 = vld [vmem:[%s1 + $0x134] sm:$0xf]
  %v205 = vld [vmem:[%s1 + $0x138] sm:$0xf]
  %v206 = vld [vmem:[%s1 + $0x13c] sm:$0xf]
  %v287 = vunpack.c.l.b16 %v127
  %v288 = vunpack.c.l.b16 %v128
  %v289 = vunpack.c.l.b16 %v129
  %v290 = vunpack.c.l.b16 %v130
  %v291 = vunpack.c.l.b16 %v131
  %v292 = vunpack.c.l.b16 %v132
  %v293 = vunpack.c.l.b16 %v133
  %v294 = vunpack.c.l.b16 %v134
  %v295 = vunpack.c.l.b16 %v135
  %v296 = vunpack.c.l.b16 %v136
  %v297 = vunpack.c.l.b16 %v137
  %v298 = vunpack.c.l.b16 %v138
  %v299 = vunpack.c.l.b16 %v139
  %v300 = vunpack.c.l.b16 %v140
  %v301 = vunpack.c.l.b16 %v141
  %v302 = vunpack.c.l.b16 %v142
  %v303 = vunpack.c.l.b16 %v143
  %v304 = vunpack.c.l.b16 %v144
  %v305 = vunpack.c.l.b16 %v145
  %v306 = vunpack.c.l.b16 %v146
  %v307 = vunpack.c.l.b16 %v147
  %v308 = vunpack.c.l.b16 %v148
  %v309 = vunpack.c.l.b16 %v149
  %v310 = vunpack.c.l.b16 %v150
  %v311 = vunpack.c.l.b16 %v151
  %v312 = vunpack.c.l.b16 %v152
  %v313 = vunpack.c.l.b16 %v153
  %v314 = vunpack.c.l.b16 %v154
  %v315 = vunpack.c.l.b16 %v155
  %v316 = vunpack.c.l.b16 %v156
  %v317 = vunpack.c.l.b16 %v157
  %v318 = vunpack.c.l.b16 %v158
  %v319 = vunpack.c.l.b16 %v159
  %v320 = vunpack.c.l.b16 %v160
  %v321 = vunpack.c.l.b16 %v161
  %v322 = vunpack.c.l.b16 %v162
  %v323 = vunpack.c.l.b16 %v163
  %v324 = vunpack.c.l.b16 %v164
  %v325 = vunpack.c.l.b16 %v165
  %v326 = vunpack.c.l.b16 %v166
  %v327 = vunpack.c.l.b16 %v167
  %v328 = vunpack.c.l.b16 %v168
  %v329 = vunpack.c.l.b16 %v169
  %v330 = vunpack.c.l.b16 %v170
  %v331 = vunpack.c.l.b16 %v171
  %v332 = vunpack.c.l.b16 %v172
  %v333 = vunpack.c.l.b16 %v173
  %v334 = vunpack.c.l.b16 %v174
  %v335 = vunpack.c.l.b16 %v175
  %v336 = vunpack.c.l.b16 %v176
  %v337 = vunpack.c.l.b16 %v177
  %v338 = vunpack.c.l.b16 %v178
  %v339 = vunpack.c.l.b16 %v179
  %v340 = vunpack.c.l.b16 %v180
  %v341 = vunpack.c.l.b16 %v181
  %v342 = vunpack.c.l.b16 %v182
  %v343 = vunpack.c.l.b16 %v183
  %v344 = vunpack.c.l.b16 %v184
  %v345 = vunpack.c.l.b16 %v185
  %v346 = vunpack.c.l.b16 %v186
  %v347 = vunpack.c.l.b16 %v187
  %v348 = vunpack.c.l.b16 %v188
  %v349 = vunpack.c.l.b16 %v189
  %v350 = vunpack.c.l.b16 %v190
  %v351 = vunpack.c.l.b16 %v191
  %v352 = vunpack.c.l.b16 %v192
  %v353 = vunpack.c.l.b16 %v193
  %v354 = vunpack.c.l.b16 %v194
  %v355 = vunpack.c.l.b16 %v195
  %v356 = vunpack.c.l.b16 %v196
  %v357 = vunpack.c.l.b16 %v197
  %v358 = vunpack.c.l.b16 %v198
  %v359 = vunpack.c.l.b16 %v199
  %v360 = vunpack.c.l.b16 %v200
  %v361 = vunpack.c.l.b16 %v201
  %v362 = vunpack.c.l.b16 %v202
  %v363 = vunpack.c.l.b16 %v203
  %v364 = vunpack.c.l.b16 %v204
  %v365 = vunpack.c.l.b16 %v205
  %v366 = vunpack.c.l.b16 %v206
  %v367 = vpack.c.b16 %v288, %v287
  %v368 = vpack.c.b16 %v290, %v289
  %v369 = vpack.c.b16 %v292, %v291
  %v370 = vpack.c.b16 %v294, %v293
  %v371 = vpack.c.b16 %v296, %v295
  %v372 = vpack.c.b16 %v298, %v297
  %v373 = vpack.c.b16 %v300, %v299
  %v374 = vpack.c.b16 %v302, %v301
  %v375 = vpack.c.b16 %v304, %v303
  %v376 = vpack.c.b16 %v306, %v305
  %v377 = vpack.c.b16 %v308, %v307
  %v378 = vpack.c.b16 %v310, %v309
  %v379 = vpack.c.b16 %v312, %v311
  %v380 = vpack.c.b16 %v314, %v313
  %v381 = vpack.c.b16 %v316, %v315
  %v382 = vpack.c.b16 %v318, %v317
  %v383 = vpack.c.b16 %v320, %v319
  %v384 = vpack.c.b16 %v322, %v321
  %v385 = vpack.c.b16 %v324, %v323
  %v386 = vpack.c.b16 %v326, %v325
  %v387 = vpack.c.b16 %v328, %v327
  %v388 = vpack.c.b16 %v330, %v329
  %v389 = vpack.c.b16 %v332, %v331
  %v390 = vpack.c.b16 %v334, %v333
  %v391 = vpack.c.b16 %v336, %v335
  %v392 = vpack.c.b16 %v338, %v337
  %v393 = vpack.c.b16 %v340, %v339
  %v394 = vpack.c.b16 %v342, %v341
  %v395 = vpack.c.b16 %v344, %v343
  %v396 = vpack.c.b16 %v346, %v345
  %v397 = vpack.c.b16 %v348, %v347
  %v398 = vpack.c.b16 %v350, %v349
  %v399 = vpack.c.b16 %v352, %v351
  %v400 = vpack.c.b16 %v354, %v353
  %v401 = vpack.c.b16 %v356, %v355
  %v402 = vpack.c.b16 %v358, %v357
  %v403 = vpack.c.b16 %v360, %v359
  %v404 = vpack.c.b16 %v362, %v361
  %v405 = vpack.c.b16 %v364, %v363
  %v406 = vpack.c.b16 %v366, %v365
  %447 = vmatprep.subr.bf16.mxu0 0
  %448 = vmatpush1.bf16.msra.mxu0 %v367
  %449 = vmatprep.subr.bf16.mxu0 0
  %450 = vmatpush1.bf16.msra.mxu0 %v368
  %451 = vmatprep.subr.bf16.mxu0 0
  %452 = vmatpush1.bf16.msra.mxu0 %v369
  %453 = vmatprep.subr.bf16.mxu0 0
  %454 = vmatpush1.bf16.msra.mxu0 %v370
  %455 = vmatprep.subr.bf16.mxu0 0
  %456 = vmatpush1.bf16.msra.mxu0 %v371
  %457 = vmatprep.subr.bf16.mxu0 0
  %458 = vmatpush1.bf16.msra.mxu0 %v372
  %459 = vmatprep.subr.bf16.mxu0 0
  %460 = vmatpush1.bf16.msra.mxu0 %v373
  %461 = vmatprep.subr.bf16.mxu0 0
  %462 = vmatpush1.bf16.msra.mxu0 %v374
  %463 = vmatprep.subr.bf16.mxu0 0
  %464 = vmatpush1.bf16.msra.mxu0 %v375
  %465 = vmatprep.subr.bf16.mxu0 0
  %466 = vmatpush1.bf16.msra.mxu0 %v376
  %467 = vmatprep.subr.bf16.mxu0 0
  %468 = vmatpush1.bf16.msra.mxu0 %v377
  %469 = vmatprep.subr.bf16.mxu0 0
  %470 = vmatpush1.bf16.msra.mxu0 %v378
  %471 = vmatprep.subr.bf16.mxu0 0
  %472 = vmatpush1.bf16.msra.mxu0 %v379
  %473 = vmatprep.subr.bf16.mxu0 0
  %474 = vmatpush1.bf16.msra.mxu0 %v380
  %475 = vmatprep.subr.bf16.mxu0 0
  %476 = vmatpush1.bf16.msra.mxu0 %v381
  %477 = vmatprep.subr.bf16.mxu0 0
  %478 = vmatpush1.bf16.msra.mxu0 %v382
  %479 = vmatprep.mubr.bf16.mxu0 %v118
  %480 = vmatmul.mubr.bf16.gmra.mrb[0].mxu0 %v117
  %v481 = vpop.f32.mrb[0].mxu0
  %v482 = vadd.f32 0.0, %v481
  %v483 = vpop.f32.mrb[0].mxu0
  %v484 = vpop.f32.mrb[0].mxu0
  %v485 = vadd.f32 0.0, %v484
  %v486 = vpop.f32.mrb[0].mxu0
  %487 = vmatprep.mubr.bf16.mxu0 %v123
  %488 = vmatmul.mubr.bf16.gmra.mrb[0].mxu0 %v122
  %v489 = vpop.f32.mrb[0].mxu0
  %v490 = vadd.f32 0.0, %v489
  %v491 = vpop.f32.mrb[0].mxu0
  %v492 = vpop.f32.mrb[0].mxu0
  %v493 = vadd.f32 0.0, %v492
  %v494 = vpop.f32.mrb[0].mxu0
  %495 = vdwg.mxu0
  %496 = vmatprep.subr.bf16.mxu0 0
  %497 = vmatpush1.bf16.msra.mxu0 %v383
  %498 = vmatprep.subr.bf16.mxu0 0
  %499 = vmatpush1.bf16.msra.mxu0 %v384
  %500 = vmatprep.subr.bf16.mxu0 0
  %501 = vmatpush1.bf16.msra.mxu0 %v385
  %502 = vmatprep.subr.bf16.mxu0 0
  %503 = vmatpush1.bf16.msra.mxu0 %v386
  %504 = vmatprep.subr.bf16.mxu0 0
  %505 = vmatpush1.bf16.msra.mxu0 %v387
  %506 = vmatprep.subr.bf16.mxu0 0
  %507 = vmatpush1.bf16.msra.mxu0 %v388
  %508 = vmatprep.subr.bf16.mxu0 0
  %509 = vmatpush1.bf16.msra.mxu0 %v389
  %510 = vmatprep.subr.bf16.mxu0 0
  %511 = vmatpush1.bf16.msra.mxu0 %v390
  %512 = vmatprep.subr.bf16.mxu0 0
  %513 = vmatpush1.bf16.msra.mxu0 %v391
  %514 = vmatprep.subr.bf16.mxu0 0
  %515 = vmatpush1.bf16.msra.mxu0 %v392
  %516 = vmatprep.subr.bf16.mxu0 0
  %517 = vmatpush1.bf16.msra.mxu0 %v393
  %518 = vmatprep.subr.bf16.mxu0 0
  %519 = vmatpush1.bf16.msra.mxu0 %v394
  %520 = vmatprep.subr.bf16.mxu0 0
  %521 = vmatpush1.bf16.msra.mxu0 %v395
  %522 = vmatprep.subr.bf16.mxu0 0
  %523 = vmatpush1.bf16.msra.mxu0 %v396
  %524 = vmatprep.subr.bf16.mxu0 0
  %525 = vmatpush1.bf16.msra.mxu0 %v397
  %526 = vmatprep.subr.bf16.mxu0 0
  %527 = vmatpush1.bf16.msra.mxu0 %v398
  %528 = vmatprep.mubr.bf16.mxu0 %v120
  %529 = vmatmul.mubr.bf16.gmra.mrb[0].mxu0 %v119
  %v530 = vpop.f32.mrb[0].mxu0
  %v531 = vadd.f32 %v482, %v530
  %v532 = vpop.f32.mrb[0].mxu0
  %v533 = vpop.f32.mrb[0].mxu0
  %v534 = vadd.f32 %v485, %v533
  %v535 = vpop.f32.mrb[0].mxu0
  %536 = vmatprep.mubr.bf16.mxu0 %v125
  %537 = vmatmul.mubr.bf16.gmra.mrb[0].mxu0 %v124
  %v538 = vpop.f32.mrb[0].mxu0
  %v539 = vadd.f32 %v490, %v538
  %v540 = vpop.f32.mrb[0].mxu0
  %v541 = vpop.f32.mrb[0].mxu0
  %v542 = vadd.f32 %v493, %v541
  %v543 = vpop.f32.mrb[0].mxu0
  %544 = vdwg.mxu0
  %545 = vmatprep.subr.bf16.mxu0 0
  %546 = vmatpush1.bf16.msra.mxu0 %v399
  %547 = vmatprep.subr.bf16.mxu0 0
  %548 = vmatpush1.bf16.msra.mxu0 %v400
  %549 = vmatprep.subr.bf16.mxu0 0
  %550 = vmatpush1.bf16.msra.mxu0 %v401
  %551 = vmatprep.subr.bf16.mxu0 0
  %552 = vmatpush1.bf16.msra.mxu0 %v402
  %553 = vmatprep.subr.bf16.mxu0 0
  %554 = vmatpush1.bf16.msra.mxu0 %v403
  %555 = vmatprep.subr.bf16.mxu0 0
  %556 = vmatpush1.bf16.msra.mxu0 %v404
  %557 = vmatprep.subr.bf16.mxu0 0
  %558 = vmatpush1.bf16.msra.mxu0 %v405
  %559 = vmatprep.subr.bf16.mxu0 0
  %560 = vmatpush1.bf16.msra.mxu0 %v406
  %561 = vmatprep.subr.bf16.mxu0 0
  %562 = vmatpush1.bf16.msra.mxu0 0
  %563 = vmatprep.subr.bf16.mxu0 0
  %564 = vmatpush1.bf16.msra.mxu0 0
  %565 = vmatprep.subr.bf16.mxu0 0
  %566 = vmatpush1.bf16.msra.mxu0 0
  %567 = vmatprep.subr.bf16.mxu0 0
  %568 = vmatpush1.bf16.msra.mxu0 0
  %569 = vmatprep.subr.bf16.mxu0 0
  %570 = vmatpush1.bf16.msra.mxu0 0
  %571 = vmatprep.subr.bf16.mxu0 0
  %572 = vmatpush1.bf16.msra.mxu0 0
  %573 = vmatprep.subr.bf16.mxu0 0
  %574 = vmatpush1.bf16.msra.mxu0 0
  %575 = vmatprep.subr.bf16.mxu0 0
  %576 = vmatpush1.bf16.msra.mxu0 0
  %577 = vmatprep.mubr.bf16.mxu0 0
  %578 = vmatmul.mubr.bf16.gmra.mrb[0].mxu0 %v121
  %v579 = vpop.f32.mrb[0].mxu0
  %v580 = vadd.f32 %v531, %v579
  %v581 = vpop.f32.mrb[0].mxu0
  %v582 = vpop.f32.mrb[0].mxu0
  %v583 = vadd.f32 %v534, %v582
  %v584 = vpop.f32.mrb[0].mxu0
  %585 = vmatprep.mubr.bf16.mxu0 0
  %586 = vmatmul.mubr.bf16.gmra.mrb[0].mxu0 %v126
  %v587 = vpop.f32.mrb[0].mxu0
  %v588 = vadd.f32 %v539, %v587
  %v589 = vpop.f32.mrb[0].mxu0
  %v590 = vpop.f32.mrb[0].mxu0
  %v591 = vadd.f32 %v542, %v590
  %v592 = vpop.f32.mrb[0].mxu0
  %593 = vdwg.mxu0
  %v594 = vld [vmem:[%s0] sm:$0xff]
  %v595 = vld [vmem:[%s0 + $0x8] sm:$0xff]
  %v596 = vld [vmem:[%s0 + $0x10] sm:$0xff]
  %v597 = vld [vmem:[%s0 + $0x18] sm:$0xff]
  %v598 = vadd.f32 %v580, %v594
  %v599 = vadd.f32 %v583, %v595
  %v600 = vadd.f32 %v588, %v596
  %v601 = vadd.f32 %v591, %v597
  %602 = vst [vmem:[%s2] sm:$0xff] %v598
  %603 = vst [vmem:[%s2 + $0x8] sm:$0xff] %v599
  %604 = vst [vmem:[%s2 + $0x10] sm:$0xff] %v600
  %605 = vst [vmem:[%s2 + $0x18] sm:$0xff] %v601
  // Predicated region
  $region10: #{mixed_op_forward.1} parent=0 // pred_check
    _
  $region11: #{mixed_op_forward.1} parent=0 // pred_check_branch
    %607 = sbr.rel (0) target = $region13
  $region12: #{mixed_op_forward.1} parent=0 // pred_region
    _
  $region13: #{mixed_op_forward.1} parent=0 // pred_fallthru
    _
  // Predicated region
  $region14: #{mixed_op_forward.1} parent=0 // pred_check
    _
  $region15: #{mixed_op_forward.1} parent=0 // pred_check_branch
    %609 = sbr.rel (0) target = $region17
  $region16: #{mixed_op_forward.1} parent=0 // pred_region
    _
  $region17: #{mixed_op_forward.1} parent=0 // pred_fallthru
    _

</llo_original>
